<compile_context>
chip_gen: v6e
topology: v6e:2x2x1
jax: 0.10.0
libtpu: 0.0.40
codegen_flags: <defaults>
</compile_context>

<pallas_src>
import functools

import jax
import jax.numpy as jnp
from jax import lax
from jax.experimental import pallas as pl
from jax.experimental.pallas import tpu as pltpu


def _round_up(x, m):
    return (x + m - 1) // m * m


# ----------------------------------------------------------------------------
# Kernel A: single-K-block matmul + BN shift + ReLU (used for stride-2 conv1)
# ----------------------------------------------------------------------------
def _matmul_bn_relu_kernel(lhs_ref, rhs_ref, shift_ref, o_ref):
    acc = jnp.dot(lhs_ref[...], rhs_ref[...],
                  preferred_element_type=jnp.float32)
    o_ref[...] = jnp.maximum(acc + shift_ref[...], 0.0).astype(o_ref.dtype)


def _matmul_bn_relu(lhs, rhs, shift, out_dtype):
    """relu(lhs @ rhs + shift).  lhs (M, K) bf16, rhs (K, N_pad) bf16."""
    M, K = lhs.shape
    n_pad = rhs.shape[1]

    tm = None
    for cand in (512, 256, 128, 64, 32, 16, 8):
        if M % cand == 0:
            tm = cand
            break
    if tm is None:                       # rare: pad M to a lane-friendly size
        m_use = _round_up(M, 128)
        lhs = jnp.pad(lhs, ((0, m_use - M), (0, 0)))
        tm = 128
    else:
        m_use = M

    tn = 256 if n_pad % 256 == 0 else 128
    # v7x megacore: make sure both TensorCores get at least one block.
    if (m_use // tm) * (n_pad // tn) == 1 and tm % 16 == 0:
        tm //= 2

    out = pl.pallas_call(
        _matmul_bn_relu_kernel,
        out_shape=jax.ShapeDtypeStruct((m_use, n_pad), out_dtype),
        grid_spec=pltpu.PrefetchScalarGridSpec(
            num_scalar_prefetch=0,
            grid=(m_use // tm, n_pad // tn),
            in_specs=[
                pl.BlockSpec((tm, K), lambda i, j: (i, 0)),
                pl.BlockSpec((K, tn), lambda i, j: (0, j)),
                pl.BlockSpec((1, tn), lambda i, j: (0, j)),
            ],
            out_specs=pl.BlockSpec((tm, tn), lambda i, j: (i, j)),
        ),
        compiler_params=pltpu.CompilerParams(
            dimension_semantics=("parallel", "parallel"),
            vmem_limit_bytes=32 * 1024 * 1024,
        ),
    )(lhs, rhs, shift.reshape(1, -1))
    return out[:M]


# ----------------------------------------------------------------------------
# Kernel B: direct 3x3 stride-1 conv + BN + (residual | 1x1 projection) + ReLU
#   Input image is spatially zero-padded and flattened to (rows, C); each of
#   the 9 taps is a row-offset slice of that flat image, matmul'd against the
#   per-tap weight and accumulated in a f32 VMEM scratch.
# ----------------------------------------------------------------------------
def _make_conv3x3_kernel(mo, wp8, has_res, has_proj):
    offs = tuple(kh * wp8 + kw for kh in range(3) for kw in range(3))

    def kernel(*refs):
        refs = list(refs)
        xp_ref = refs.pop(0)       # (1, R, C)   bf16, padded flat image
        w_ref = refs.pop(0)        # (9, C, tn)  bf16, BN scale folded
        shift_ref = refs.pop(0)    # (1, tn)     f32
        res_ref = refs.pop(0) if has_res else None
        if has_proj:
            xs_ref = refs.pop(0)   # (1, mo, Cin) bf16, strided input
            wsc_ref = refs.pop(0)  # (Cin, tn)    bf16
        o_ref = refs.pop(0)        # (1, mo, tn)
        acc_ref = refs.pop(0)      # (mo, tn) f32 scratch

        acc_ref[...] = jnp.dot(xp_ref[0, pl.ds(offs[0], mo), :], w_ref[0],
                               preferred_element_type=jnp.float32)
        for t in range(1, 9):
            acc_ref[...] += jnp.dot(xp_ref[0, pl.ds(offs[t], mo), :], w_ref[t],
                                    preferred_element_type=jnp.float32)
        if has_proj:
            acc_ref[...] += jnp.dot(xs_ref[0], wsc_ref[...],
                                    preferred_element_type=jnp.float32)

        y = acc_ref[...] + shift_ref[...]
        if has_res:
            y = y + res_ref[0].astype(jnp.float32)
        o_ref[0] = jnp.maximum(y, 0.0).astype(o_ref.dtype)

    return kernel


def _conv3x3_s1_fused(xp_flat, w_taps, shift, *, mo, wp8,
                      res=None, xs=None, wsc=None, out_dtype=jnp.bfloat16):
    nb, rows, c_in = xp_flat.shape
    n_pad = w_taps.shape[-1]
    tn = 256 if n_pad % 256 == 0 else 128

    in_specs = [
        pl.BlockSpec((1, rows, c_in), lambda n, j: (n, 0, 0)),
        pl.BlockSpec((9, c_in, tn), lambda n, j: (0, 0, j)),
        pl.BlockSpec((1, tn), lambda n, j: (0, j)),
    ]
    args = [xp_flat, w_taps, shift.reshape(1, -1)]

    has_res = res is not None
    has_proj = xs is not None
    if has_res:
        in_specs.append(pl.BlockSpec((1, mo, tn), lambda n, j: (n, 0, j)))
        args.append(res)
    if has_proj:
        cin_sc = xs.shape[-1]
        in_specs.append(pl.BlockSpec((1, mo, cin_sc), lambda n, j: (n, 0, 0)))
        in_specs.append(pl.BlockSpec((cin_sc, tn), lambda n, j: (0, j)))
        args += [xs, wsc]

    kernel = _make_conv3x3_kernel(mo, wp8, has_res, has_proj)

    out = pl.pallas_call(
        kernel,
        out_shape=jax.ShapeDtypeStruct((nb, mo, n_pad), out_dtype),
        grid_spec=pltpu.PrefetchScalarGridSpec(
            num_scalar_prefetch=0,
            grid=(nb, n_pad // tn),
            in_specs=in_specs,
            out_specs=pl.BlockSpec((1, mo, tn), lambda n, j: (n, 0, j)),
            scratch_shapes=[pltpu.VMEM((mo, tn), jnp.float32)],
        ),
        compiler_params=pltpu.CompilerParams(
            dimension_semantics=("parallel", "parallel"),
            vmem_limit_bytes=32 * 1024 * 1024,
        ),
    )(*args)
    return out


# ----------------------------------------------------------------------------
# Glue: im2col (stride-2 path only), BN folding, weight reshaping
# ----------------------------------------------------------------------------
def _im2col_3x3(x_nhwc, stride, k_pad):
    """x: (N,H,W,C) -> patches (N*Ho*Wo, k_pad), tap order (kh, kw, c)."""
    n, h, w, c = x_nhwc.shape
    xp = jnp.pad(x_nhwc, ((0, 0), (1, 1), (1, 1), (0, 0)))
    ho = (h + 2 - 3) // stride + 1
    wo = (w + 2 - 3) // stride + 1
    cols = []
    for kh in range(3):
        for kw in range(3):
            cols.append(xp[:,
                           kh:kh + stride * (ho - 1) + 1:stride,
                           kw:kw + stride * (wo - 1) + 1:stride, :])
    if k_pad > 9 * c:        # fuse lane padding into the same concatenate
        cols.append(jnp.zeros((n, ho, wo, k_pad - 9 * c), x_nhwc.dtype))
    patches = jnp.concatenate(cols, axis=-1)
    return patches.reshape(n * ho * wo, k_pad), ho, wo


def _fold_bn(gamma, beta, mean, var, eps=1e-5):
    scale = gamma / jnp.sqrt(var + eps)
    shift = beta - mean * scale
    return scale.astype(jnp.float32), shift.astype(jnp.float32)


def _w3x3_to_mat(w_oihw, scale, k_pad, n_pad):
    cout, cin = w_oihw.shape[0], w_oihw.shape[1]
    m = jnp.transpose(w_oihw, (2, 3, 1, 0)).reshape(9 * cin, cout)
    m = m.astype(jnp.float32) * scale[None, :]
    m = jnp.pad(m, ((0, k_pad - 9 * cin), (0, n_pad - cout)))
    return m.astype(jnp.bfloat16)


def _w3x3_to_taps(w_oihw, scale, c_pad, n_pad):
    cout, cin = w_oihw.shape[0], w_oihw.shape[1]
    m = jnp.transpose(w_oihw, (2, 3, 1, 0)).reshape(9, cin, cout)
    m = m.astype(jnp.float32) * scale[None, None, :]
    m = jnp.pad(m, ((0, 0), (0, c_pad - cin), (0, n_pad - cout)))
    return m.astype(jnp.bfloat16)


# ----------------------------------------------------------------------------
# ResidualBlock forward
# ----------------------------------------------------------------------------
def residual_block_forward(x_nchw, params, stride):
    """Forward pass of ResidualBlock.  x: (N, Cin, H, W) float32."""
    x = jnp.transpose(x_nchw, (0, 2, 3, 1)).astype(jnp.float32)   # NHWC
    n, h, w, cin = x.shape
    cout = params["w1"].shape[0]
    x_bf = x.astype(jnp.bfloat16)

    n_pad = _round_up(cout, 128)
    cin_p = _round_up(cin, 8)

    ho = (h + 2 - 3) // stride + 1
    wo = (w + 2 - 3) // stride + 1
    wp8 = _round_up(wo + 2, 8)        # padded image width (lane-flat rows)
    hp2 = ho + 3                      # 1 top pad + >=1 bottom pad + tap slack
    mo = ho * wp8                     # output rows per image (padded layout)

    s1, b1 = _fold_bn(*params["bn1"])
    s2, b2 = _fold_bn(*params["bn2"])
    b1_p = jnp.pad(b1, (0, n_pad - cout))

    # --- stage 1: conv1(3x3, stride) + bn1 + relu ---------------------------
    if stride == 1:
        # direct conv kernel (no HBM im2col)
        xp1 = jnp.pad(x_bf, ((0, 0), (1, hp2 - h - 1), (1, wp8 - w - 1),
                             (0, cin_p - cin))).reshape(n, hp2 * wp8, cin_p)
        w1t = _w3x3_to_taps(params["w1"], s1, cin_p, n_pad)
        out1 = _conv3x3_s1_fused(xp1, w1t, b1_p, mo=mo, wp8=wp8,
                                 out_dtype=jnp.bfloat16)          # (N,mo,n_pad)
        # keep zero-padded channels; slice valid spatial region only
        out1_nhwc = out1.reshape(n, ho, wp8, n_pad)[:, :, :wo, :]
    else:
        k_pad = _round_up(9 * cin, 128)
        p1, _, _ = _im2col_3x3(x_bf, stride, k_pad)
        w1m = _w3x3_to_mat(params["w1"], s1, k_pad, n_pad)
        out1 = _matmul_bn_relu(p1, w1m, b1_p, jnp.bfloat16)       # (M1, n_pad)
        out1_nhwc = out1.reshape(n, ho, wo, n_pad)

    # --- stage 2: conv2(3x3, 1) + bn2 + shortcut + relu ---------------------
    c2 = n_pad   # stage-2 input channels (padded channels are exact zeros)
    xp2 = jnp.pad(out1_nhwc, ((0, 0), (1, hp2 - ho - 1), (1, wp8 - wo - 1),
                              (0, 0))).reshape(n, hp2 * wp8, c2)
    w2t = _w3x3_to_taps(params["w2"], s2, c2, n_pad)

    if stride != 1 or cin != cout:
        # projection shortcut (1x1 conv + bn) as a 10th in-kernel matmul
        ssc, bsc = _fold_bn(*params["bn_sc"])
        shift2 = jnp.pad(b2 + bsc, (0, n_pad - cout))
        xs = x_bf[:, ::stride, ::stride, :]
        xs = jnp.pad(xs, ((0, 0), (0, 0), (0, wp8 - wo),
                          (0, cin_p - cin))).reshape(n, mo, cin_p)
        wsc = (params["w_sc"].reshape(cout, cin).T.astype(jnp.float32)
               * ssc[None, :])
        wsc = jnp.pad(wsc, ((0, cin_p - cin),
                            (0, n_pad - cout))).astype(jnp.bfloat16)
        out = _conv3x3_s1_fused(xp2, w2t, shift2, mo=mo, wp8=wp8,
                                xs=xs, wsc=wsc, out_dtype=jnp.float32)
    else:
        # identity shortcut, passed in bf16
        shift2 = jnp.pad(b2, (0, n_pad - cout))
        res = jnp.pad(x_bf, ((0, 0), (0, 0), (0, wp8 - w),
                             (0, n_pad - cin))).reshape(n, mo, n_pad)
        out = _conv3x3_s1_fused(xp2, w2t, shift2, mo=mo, wp8=wp8,
                                res=res, out_dtype=jnp.float32)

    out_nhwc = out.reshape(n, ho, wp8, n_pad)[:, :, :wo, :cout]
    return jnp.transpose(out_nhwc, (0, 3, 1, 2))                  # NCHW


# ----------------------------------------------------------------------------
# Pure-JAX reference (lax.conv, f32) for verification
# ----------------------------------------------------------------------------
def _ref_conv_bn(x_nhwc, w_oihw, bn, stride, pad):
    w_hwio = jnp.transpose(w_oihw, (2, 3, 1, 0))
    y = lax.conv_general_dilated(
        x_nhwc, w_hwio, (stride, stride), [(pad, pad), (pad, pad)],
        dimension_numbers=("NHWC", "HWIO", "NHWC"))
    scale, shift = _fold_bn(*bn)
    return y * scale[None, None, None, :] + shift[None, None, None, :]


def residual_block_reference(x_nchw, params, stride):
    x = jnp.transpose(x_nchw, (0, 2, 3, 1)).astype(jnp.float32)
    cin = x.shape[-1]
    cout = params["w1"].shape[0]
    out = jax.nn.relu(_ref_conv_bn(x, params["w1"], params["bn1"], stride, 1))
    out = _ref_conv_bn(out, params["w2"], params["bn2"], 1, 1)
    if stride != 1 or cin != cout:
        sc = _ref_conv_bn(x, params["w_sc"], params["bn_sc"], stride, 0)
    else:
        sc = x
    out = jax.nn.relu(out + sc)
    return jnp.transpose(out, (0, 3, 1, 2))


# ----------------------------------------------------------------------------
# Deterministic parameter init
# ----------------------------------------------------------------------------
def make_params(key, in_channels, out_channels, stride):
    ks = jax.random.split(key, 16)

    def bn_params(k0, k1, k2, k3, c):
        gamma = jax.random.uniform(k0, (c,), jnp.float32, 0.5, 1.5)
        beta = 0.1 * jax.random.normal(k1, (c,), jnp.float32)
        mean = 0.1 * jax.random.normal(k2, (c,), jnp.float32)
        var = jax.random.uniform(k3, (c,), jnp.float32, 0.5, 1.5)
        return (gamma, beta, mean, var)

    params = {
        "w1": 0.1 * jax.random.normal(
            ks[0], (out_channels, in_channels, 3, 3), jnp.float32),
        "bn1": bn_params(ks[1], ks[2], ks[3], ks[4], out_channels),
        "w2": 0.1 * jax.random.normal(
            ks[5], (out_channels, out_channels, 3, 3), jnp.float32),
        "bn2": bn_params(ks[6], ks[7], ks[8], ks[9], out_channels),
    }
    if stride != 1 or in_channels != out_channels:
        params["w_sc"] = 0.1 * jax.random.normal(
            ks[10], (out_channels, in_channels, 1, 1), jnp.float32)
        params["bn_sc"] = bn_params(ks[11], ks[12], ks[13], ks[14],
                                    out_channels)
    return params


if __name__ == "__main__":
    key = jax.random.PRNGKey(0)
    kx, kp1, kp2 = jax.random.split(key, 3)

    # Case 1: projection shortcut (stride=2, channel change) -----------------
    N, Cin, H, W = 2, 4, 16, 16
    Cout, stride = 8, 2
    x = jax.random.normal(kx, (N, Cin, H, W), jnp.float32)
    params = make_params(kp1, Cin, Cout, stride)

    out = jax.block_until_ready(residual_block_forward(x, params, stride))
    ref = jax.block_until_ready(residual_block_reference(x, params, stride))
    assert out.shape == (N, Cout, H // stride, W // stride), out.shape
    assert jnp.allclose(out, ref, rtol=3e-2, atol=3e-2), \
        float(jnp.max(jnp.abs(out - ref)))

    # Case 2: identity shortcut (stride=1, same channels) --------------------
    params_id = make_params(kp2, Cin, Cin, 1)
    out_id = jax.block_until_ready(residual_block_forward(x, params_id, 1))
    ref_id = jax.block_until_ready(residual_block_reference(x, params_id, 1))
    assert out_id.shape == (N, Cin, H, W), out_id.shape
    assert jnp.allclose(out_id, ref_id, rtol=3e-2, atol=3e-2), \
        float(jnp.max(jnp.abs(out_id - ref_id)))

    print("KERNEL_OK")
</pallas_src>

<mosaic_0001>
module attributes {stable_mosaic.version = 11 : i64} {
  func.func @_matmul_bn_relu_kernel(%arg0: i32, %arg1: i32, %arg2: memref<64x128xbf16, #tpu.memory_space<vmem>>, %arg3: memref<128x128xbf16, #tpu.memory_space<vmem>>, %arg4: memref<1x128xf32, #tpu.memory_space<vmem>>, %arg5: memref<64x128xbf16, #tpu.memory_space<vmem>>) attributes {dimension_semantics = [#tpu.dimension_semantics<parallel>, #tpu.dimension_semantics<parallel>], iteration_bounds = array<i64: 2, 1>, scalar_prefetch = 0 : i64, scratch_operands = 0 : i64, tpu.core_type = #tpu.core_type<tc>, window_params = [{transform_indices = @transform_0, window_bounds = array<i64: 64, 128>}, {transform_indices = @transform_1, window_bounds = array<i64: 128, 128>}, {transform_indices = @transform_2, window_bounds = array<i64: 1, 128>}, {transform_indices = @transform_3, window_bounds = array<i64: 64, 128>}]} {
    %c0 = arith.constant 0 : index
    %c0_0 = arith.constant 0 : index
    %0 = vector.load %arg2[%c0, %c0_0] : memref<64x128xbf16, #tpu.memory_space<vmem>>, vector<64x128xbf16>
    %c0_1 = arith.constant 0 : index
    %c0_2 = arith.constant 0 : index
    %1 = vector.load %arg3[%c0_1, %c0_2] : memref<128x128xbf16, #tpu.memory_space<vmem>>, vector<128x128xbf16>
    %cst = arith.constant dense<0.000000e+00> : vector<64x128xf32>
    %2 = tpu.matmul %0, %1, %cst {dimension_numbers = #tpu.dot_dimension_numbers<[1], [0], [0], [1], [0, 0, 1, 1], [], []>} : vector<64x128xbf16>, vector<128x128xbf16>, vector<64x128xf32> -> vector<64x128xf32>
    %c0_3 = arith.constant 0 : index
    %c0_4 = arith.constant 0 : index
    %3 = vector.load %arg4[%c0_3, %c0_4] : memref<1x128xf32, #tpu.memory_space<vmem>>, vector<1x128xf32>
    %4 = vector.broadcast %3 : vector<1x128xf32> to vector<64x128xf32>
    %5 = arith.addf %2, %4 : vector<64x128xf32>
    %cst_5 = arith.constant 0.000000e+00 : f32
    %6 = vector.broadcast %cst_5 : f32 to vector<64x128xf32>
    %7 = arith.maximumf %5, %6 : vector<64x128xf32>
    %8 = arith.truncf %7 : vector<64x128xf32> to vector<64x128xbf16>
    %c0_6 = arith.constant 0 : index
    %c0_7 = arith.constant 0 : index
    %9 = vector.load %arg5[%c0_6, %c0_7] : memref<64x128xbf16, #tpu.memory_space<vmem>>, vector<64x128xbf16>
    tpu.vector_store %arg5[%c0_6, %c0_7], %8 {strides = array<i32>} : memref<64x128xbf16, #tpu.memory_space<vmem>>, vector<64x128xbf16>,
    return
  }
  func.func @transform_0(%arg0: i32, %arg1: i32) -> (i32, i32) {
    %c0_i32 = arith.constant 0 : i32
    %c0_i32_0 = arith.constant 0 : i32
    return %arg0, %c0_i32 : i32, i32
  }
  func.func @transform_1(%arg0: i32, %arg1: i32) -> (i32, i32) {
    %c0_i32 = arith.constant 0 : i32
    %c0_i32_0 = arith.constant 0 : i32
    return %c0_i32, %arg1 : i32, i32
  }
  func.func @transform_2(%arg0: i32, %arg1: i32) -> (i32, i32) {
    %c0_i32 = arith.constant 0 : i32
    %c0_i32_0 = arith.constant 0 : i32
    return %c0_i32, %arg1 : i32, i32
  }
  func.func @transform_3(%arg0: i32, %arg1: i32) -> (i32, i32) {
    %c0_i32 = arith.constant 0 : i32
    return %arg0, %arg1 : i32, i32
  }
}

</mosaic_0001>

<llo_original>
// kernel: tpu_custom_call.1
$region0: #{tpu_custom_call.1}
  #allocation0 [shape = 'u32[]', space=smem, size = 0x4, offset = 0x4, fixed_abs, tag = 'smem constant byte address 0x4 - core index']
  #allocation1 [shape = 'u32[144,128]{1,0:T(1,128)}', space=vmem, size = 0x12000, scoped, tag = 'internal scratch']
  %s0 = inlined_call_operand.hbm [shape: bf16[128,128], index: 0, kind: input, shape index: {}]
  %s1 = inlined_call_operand.hbm [shape: bf16[128,128], index: 1, kind: input, shape index: {}]
  %s2 = inlined_call_operand.vmem [shape: f32[1,128], index: 2, kind: input, shape index: {}]
  %s3 = inlined_call_operand.hbm [shape: bf16[128,128], index: 3, kind: output, shape index: {}]
  %s4 = sld [smem:[#allocation0]]
  $region53: #{tpu_custom_call.1} parent=0
    _
  %s6 = ssub.s32 1, %s4
  %s7 = scalar_select 0, %s6, %s4
  $region1: #{tpu_custom_call.1} parent=0
    #allocation2 [shape = 'u8[32768]{0}', space=vmem, size = 0x8000, scoped, tag = 'input window, operand 0']
    #allocation3 [shape = 's32[2]{0}', space=sflag, size = 0x8, scoped, tag = 'scoped memory for tpu_custom_call.1']
    #allocation4 [shape = 's32[2]{0}', space=sflag, size = 0x8, scoped, tag = 'scoped memory for tpu_custom_call.1']
    #allocation5 [shape = 'u8[32768]{0}', space=vmem, size = 0x8000, scoped, tag = 'input window, operand 1, single buffered']
    #allocation6 [shape = 's32[1]{0}', space=sflag, size = 0x4, scoped, tag = 'scoped memory for tpu_custom_call.1']
    #allocation7 [shape = 'u8[32768]{0}', space=vmem, size = 0x8000, scoped, tag = 'output window, operand 0']
    %8 = vsyncpa [#allocation3], 0
    %s9 = scalar_lea.sflag [#allocation3], 1
    %10 = vsyncpa %s9, 0
    %11 = vsyncpa [#allocation6], 0
    %12 = vsyncpa [#allocation4], 0
    %s13 = scalar_lea.sflag [#allocation4], 1
    %14 = vsyncpa %s13, 0
    loop: start=0, step=1, limit=4
    $region2: #{tpu_custom_call.1} parent=1 // loop_pre_header
      _
    $region3: #{tpu_custom_call.1} parent=1 // loop_header
      %s16 = sphi 0, %s20
      %p17 = scmp.ge.s32.totalorder %s16, 4
      %s23 = sphi 0, %s35
      %s24 = sphi 0, %s31
      %s25 = sphi 0, %s23
      %s26 = sphi 0, %s24
      %s27 = sphi 0, %s25
      %s28 = sphi 0, %s26
      %s38 = sphi 0, %s40
      %s41 = sphi 0, %s38
      %s42 = sphi 0, %s41
      %s58 = sphi 0, %s42
      %s64 = sphi 0, %s66
      %s67 = sphi 0, %s64
      %s68 = sphi 0, %s67
      %s84 = sphi 0, %s68
      %s90 = sphi 0, %s92
      %s93 = sphi 0, %s90
      %s94 = sphi 0, %s93
      %s110 = sphi 0, %s94
      %s118 = sphi 0, %s120
      %s121 = sphi 0, %s118
      %s122 = sphi 0, %s121
      %s138 = sphi 0, %s122
    $region4: #{tpu_custom_call.1} parent=1 // loop_header_branch
      %19 = sbr.rel (%p17) target = $region8
    $region5: #{tpu_custom_call.1} parent=1 // loop_body
      %s21 = ssub.s32 %s16, 1
      %s22 = ssub.s32 %s16, 2
      %s29 = sadd.s32 1, %s24
      %p30 = scmp.ge.s32.totalorder %s29, 1
      %s31 = scalar_select %p30, 0, %s29
      %s32 = sadd.s32 1, %s23
      %s33 = scalar_select %p30, %s32, %s23
      %p34 = scmp.ge.s32.totalorder %s33, 2
      %s35 = scalar_select %p34, 0, %s33
      %s36 = ssub.s32 %s23, %s35
      %p37 = scmp.eq.s32.totalorder %s36, 0
      %s39 = sadd.s32 %s38, 1
      %s40 = scalar_select %p37, %s38, %s39
      %p43 = pneg %p37
      %p44 = scmp.eq.s32.totalorder %s16, 1
      %p45 = por %p43, %p44
      %p46 = scmp.ne.s32.totalorder %s38, %s41
      %p47 = scmp.eq.s32.totalorder %s16, 0
      %p48 = por %p46, %p47
      %p49 = scmp.ne.s32.totalorder %s38, %s41
      %p50 = scmp.eq.s32.totalorder %s21, 1
      %p51 = por %p49, %p50
      %p52 = scmp.ne.s32.totalorder %s41, %s42
      %p53 = scmp.eq.s32.totalorder %s21, 0
      %p54 = por %p52, %p53
      %p55 = scmp.ne.s32.totalorder %s41, %s42
      %p56 = scmp.eq.s32.totalorder %s22, 1
      %p57 = por %p55, %p56
      %p59 = scmp.ne.s32.totalorder %s42, %s58
      %p60 = scmp.eq.s32.totalorder %s22, 0
      %p61 = por %p59, %p60
      %s62 = ssub.s32 %s24, %s31
      %p63 = scmp.eq.s32.totalorder %s62, 0
      %s65 = sadd.s32 %s64, 1
      %s66 = scalar_select %p63, %s64, %s65
      %p69 = pneg %p63
      %p70 = scmp.eq.s32.totalorder %s16, 1
      %p71 = por %p69, %p70
      %p72 = scmp.ne.s32.totalorder %s64, %s67
      %p73 = scmp.eq.s32.totalorder %s16, 0
      %p74 = por %p72, %p73
      %p75 = scmp.ne.s32.totalorder %s64, %s67
      %p76 = scmp.eq.s32.totalorder %s21, 1
      %p77 = por %p75, %p76
      %p78 = scmp.ne.s32.totalorder %s67, %s68
      %p79 = scmp.eq.s32.totalorder %s21, 0
      %p80 = por %p78, %p79
      %p81 = scmp.ne.s32.totalorder %s67, %s68
      %p82 = scmp.eq.s32.totalorder %s22, 1
      %p83 = por %p81, %p82
      %p85 = scmp.ne.s32.totalorder %s68, %s84
      %p86 = scmp.eq.s32.totalorder %s22, 0
      %p87 = por %p85, %p86
      %s88 = ssub.s32 %s24, %s31
      %p89 = scmp.eq.s32.totalorder %s88, 0
      %s91 = sadd.s32 %s90, 1
      %s92 = scalar_select %p89, %s90, %s91
      %p95 = pneg %p89
      %p96 = scmp.eq.s32.totalorder %s16, 1
      %p97 = por %p95, %p96
      %p98 = scmp.ne.s32.totalorder %s90, %s93
      %p99 = scmp.eq.s32.totalorder %s16, 0
      %p100 = por %p98, %p99
      %p101 = scmp.ne.s32.totalorder %s90, %s93
      %p102 = scmp.eq.s32.totalorder %s21, 1
      %p103 = por %p101, %p102
      %p104 = scmp.ne.s32.totalorder %s93, %s94
      %p105 = scmp.eq.s32.totalorder %s21, 0
      %p106 = por %p104, %p105
      %p107 = scmp.ne.s32.totalorder %s93, %s94
      %p108 = scmp.eq.s32.totalorder %s22, 1
      %p109 = por %p107, %p108
      %p111 = scmp.ne.s32.totalorder %s94, %s110
      %p112 = scmp.eq.s32.totalorder %s22, 0
      %p113 = por %p111, %p112
      %s114 = ssub.s32 %s23, %s35
      %s115 = ssub.s32 %s24, %s31
      %s116 = sor.u32 %s114, %s115
      %p117 = scmp.eq.s32.totalorder %s116, 0
      %s119 = sadd.s32 %s118, 1
      %s120 = scalar_select %p117, %s118, %s119
      %p123 = pneg %p117
      %p124 = scmp.eq.s32.totalorder %s16, 1
      %p125 = por %p123, %p124
      %p126 = scmp.ne.s32.totalorder %s118, %s121
      %p127 = scmp.eq.s32.totalorder %s16, 0
      %p128 = por %p126, %p127
      %p129 = scmp.ne.s32.totalorder %s118, %s121
      %p130 = scmp.eq.s32.totalorder %s21, 1
      %p131 = por %p129, %p130
      %p132 = scmp.ne.s32.totalorder %s121, %s122
      %p133 = scmp.eq.s32.totalorder %s21, 0
      %p134 = por %p132, %p133
      %p135 = scmp.ne.s32.totalorder %s121, %s122
      %p136 = scmp.eq.s32.totalorder %s22, 1
      %p137 = por %p135, %p136
      %p139 = scmp.ne.s32.totalorder %s122, %s138
      %p140 = scmp.eq.s32.totalorder %s22, 0
      %p141 = por %p139, %p140
      %p142 = scmp.le.s32.totalorder 1, %s16
      %p143 = scmp.lt.s32.totalorder %s16, 3
      %p144 = pnand %p142, %p143
      %p145 = pneg %p144
      // Predicated region
      $region9: #{tpu_custom_call.1} parent=5 // pred_check
        _
      $region10: #{tpu_custom_call.1} parent=5 // pred_check_branch
        %147 = sbr.rel (%p144) target = $region12
      $region11: #{tpu_custom_call.1} parent=5 // pred_region
        %s148 = ssub.s32 %s16, 1
        // Predicated region
        $region13: #{tpu_custom_call.1} parent=11 // pred_check
          %p149 = pneg %p80
        $region14: #{tpu_custom_call.1} parent=11 // pred_check_branch
          %151 = sbr.rel (%p149) target = $region16
        $region15: #{tpu_custom_call.1} parent=11 // pred_region
          %s153 = ssub.s32 1024, 1024
          %154 = vsyncadd [#allocation6], %s153
          %s155 = smul.addr %s26, 64
          %s156 = scalar_lea.hbm %s1, %s155
          %s157 = sshll.u32 [#allocation5], 4
          %s158 = int_to_ptr.vmem [resolvable:$true] %s157
          %163 = dma.hbm_to_vmem [thread:$0]  %s156, 1024, %s158, [#allocation6], 64, 64, 4
        $region16: #{tpu_custom_call.1} parent=11 // pred_fallthru
          _
        // Predicated region
        $region17: #{tpu_custom_call.1} parent=11 // pred_check
          %p164 = pneg %p106
        $region18: #{tpu_custom_call.1} parent=11 // pred_check_branch
          %166 = sbr.rel (%p164) target = $region20
        $region19: #{tpu_custom_call.1} parent=11 // pred_region
          %p167 = scmp.lt.s32.totalorder %s26, 0
          %s168 = scalar_select %p167, %s26, 0
          %s169 = scalar_lea.vmem %s2, %s168
        $region20: #{tpu_custom_call.1} parent=11 // pred_fallthru
          _
      $region12: #{tpu_custom_call.1} parent=5 // pred_fallthru
        _
      %p170 = scmp.lt.s32.totalorder %s16, 2
      // Predicated region
      $region21: #{tpu_custom_call.1} parent=5 // pred_check
        %p171 = pneg %p170
      $region22: #{tpu_custom_call.1} parent=5 // pred_check_branch
        %173 = sbr.rel (%p171) target = $region24
      $region23: #{tpu_custom_call.1} parent=5 // pred_region
        // Predicated region
        $region25: #{tpu_custom_call.1} parent=23 // pred_check
          %p174 = pneg %p48
        $region26: #{tpu_custom_call.1} parent=23 // pred_check_branch
          %176 = sbr.rel (%p174) target = $region28
        $region27: #{tpu_custom_call.1} parent=23 // pred_region
          %s177 = sand.u32 %s38, 1
          %s178 = scalar_lea.sflag [#allocation3], %s177
          %s179 = sand.u32 %s38, 1
          %s180 = smul.addr %s179, 32
          %s181 = scalar_lea.vmem [#allocation2], %s180
          %s182 = smul.u32 8, %s23
          %s184 = ssub.s32 512, 512
          %185 = vsyncadd %s178, %s184
          %s186 = smul.addr %s182, 64
          %s187 = scalar_lea.hbm %s0, %s186
          %s188 = sshll.u32 %s181, 4
          %s189 = int_to_ptr.vmem [resolvable:$true] %s188
          %194 = dma.hbm_to_vmem [thread:$0]  %s187, 512, %s189, %s178, 64, 64, 4
        $region28: #{tpu_custom_call.1} parent=23 // pred_fallthru
          _
      $region24: #{tpu_custom_call.1} parent=5 // pred_fallthru
        _
      %p195 = scmp.le.s32.totalorder 1, %s16
      %p196 = scmp.lt.s32.totalorder %s16, 3
      %p197 = pnand %p195, %p196
      %p198 = pneg %p197
      // Predicated region
      $region29: #{tpu_custom_call.1} parent=5 // pred_check
        _
      $region30: #{tpu_custom_call.1} parent=5 // pred_check_branch
        %200 = sbr.rel (%p197) target = $region32
      $region31: #{tpu_custom_call.1} parent=5 // pred_region
        %s201 = ssub.s32 %s16, 1
        %s202 = sand.u32 %s41, 1
        %s203 = scalar_lea.sflag [#allocation3], %s202
        %s204 = sand.u32 %s41, 1
        %s205 = smul.addr %s204, 32
        %s206 = scalar_lea.vmem [#allocation2], %s205
        // Predicated region
        $region33: #{tpu_custom_call.1} parent=31 // pred_check
          %p207 = pneg %p54
        $region34: #{tpu_custom_call.1} parent=31 // pred_check_branch
          %209 = sbr.rel (%p207) target = $region36
        $region35: #{tpu_custom_call.1} parent=31 // pred_region
          %210 = dma.done %s203, 512
        $region36: #{tpu_custom_call.1} parent=31 // pred_fallthru
          _
        // Predicated region
        $region37: #{tpu_custom_call.1} parent=31 // pred_check
          %p211 = pneg %p80
        $region38: #{tpu_custom_call.1} parent=31 // pred_check_branch
          %213 = sbr.rel (%p211) target = $region40
        $region39: #{tpu_custom_call.1} parent=31 // pred_region
          %214 = dma.done [#allocation6], 1024
        $region40: #{tpu_custom_call.1} parent=31 // pred_fallthru
          _
        %s215 = sand.u32 %s41, 1
        %s216 = scalar_lea.sflag [#allocation3], %s215
        %s217 = sand.u32 %s41, 1
        %s218 = smul.addr %s217, 32
        %s219 = scalar_lea.vmem [#allocation2], %s218
        %p220 = pneg %p54
        %p221 = pneg %p51
        %p222 = pneg %p80
        %p223 = pneg %p77
        %p224 = scmp.lt.s32.totalorder %s26, 0
        %s225 = scalar_select %p224, %s26, 0
        %s226 = scalar_lea.vmem %s2, %s225
        %p227 = pneg %p106
        %p228 = pneg %p103
        %p229 = pneg %p134
        %p230 = pneg %p131
        %s231 = sand.u32 %s121, 1
        %s232 = scalar_lea.sflag [#allocation4], %s231
        %s233 = sand.u32 %s121, 1
        %s234 = smul.addr %s233, 32
        %s235 = scalar_lea.vmem [#allocation7], %s234
        %s236 = smul.u32 8, %s25
        %p237 = scmp.lt.s32.totalorder %s26, 0
        %s238 = scalar_select %p237, %s26, 0
        %s239 = scalar_lea.vmem %s2, %s238
        %s240 = smul.u32 8, %s25
        %v242 = vld [vmem:[%s206] sm:$0xf]
        %v243 = vld [vmem:[%s206 + $0x4] sm:$0xf]
        %v244 = vld [vmem:[%s206 + $0x8] sm:$0xf]
        %v245 = vld [vmem:[%s206 + $0xc] sm:$0xf]
        %v246 = vld [vmem:[%s206 + $0x10] sm:$0xf]
        %v247 = vld [vmem:[%s206 + $0x14] sm:$0xf]
        %v248 = vld [vmem:[%s206 + $0x18] sm:$0xf]
        %v249 = vld [vmem:[%s206 + $0x1c] sm:$0xf]
        %v250 = vld [vmem:[#allocation5] sm:$0xf]
        %v251 = vld [vmem:[#allocation5 + $0x4] sm:$0xf]
        %v252 = vld [vmem:[#allocation5 + $0x8] sm:$0xf]
        %v253 = vld [vmem:[#allocation5 + $0xc] sm:$0xf]
        %v254 = vld [vmem:[#allocation5 + $0x10] sm:$0xf]
        %v255 = vld [vmem:[#allocation5 + $0x14] sm:$0xf]
        %v256 = vld [vmem:[#allocation5 + $0x18] sm:$0xf]
        %v257 = vld [vmem:[#allocation5 + $0x1c] sm:$0xf]
        %v258 = vld [vmem:[#allocation5 + $0x20] sm:$0xf]
        %v259 = vld [vmem:[#allocation5 + $0x24] sm:$0xf]
        %v260 = vld [vmem:[#allocation5 + $0x28] sm:$0xf]
        %v261 = vld [vmem:[#allocation5 + $0x2c] sm:$0xf]
        %v262 = vld [vmem:[#allocation5 + $0x30] sm:$0xf]
        %v263 = vld [vmem:[#allocation5 + $0x34] sm:$0xf]
        %v264 = vld [vmem:[#allocation5 + $0x38] sm:$0xf]
        %v265 = vld [vmem:[#allocation5 + $0x3c] sm:$0xf]
        %v266 = vld [vmem:[%s239] sm:$0x1]
        %v268 = vlaneseq
        %v269 = vshrl.u32 %v268, 7
        %v270 = vsub.s32 0, %v269
        %v271 = vrot.slane %v266, %v270
        %v281 = vunpack.c.l.b16 %v242
        %v282 = vunpack.c.l.b16 %v243
        %v283 = vunpack.c.l.b16 %v244
        %v284 = vunpack.c.l.b16 %v245
        %v285 = vunpack.c.l.b16 %v246
        %v286 = vunpack.c.l.b16 %v247
        %v287 = vunpack.c.l.b16 %v248
        %v288 = vunpack.c.l.b16 %v249
        %v289 = vpack.c.b16 %v282, %v281
        %v290 = vpack.c.b16 %v284, %v283
        %v291 = vpack.c.b16 %v286, %v285
        %v292 = vpack.c.b16 %v288, %v287
        %v313 = vunpack.c.l.b16 %v250
        %v314 = vunpack.c.l.b16 %v251
        %v315 = vunpack.c.l.b16 %v252
        %v316 = vunpack.c.l.b16 %v253
        %v317 = vunpack.c.l.b16 %v254
        %v318 = vunpack.c.l.b16 %v255
        %v319 = vunpack.c.l.b16 %v256
        %v320 = vunpack.c.l.b16 %v257
        %v321 = vunpack.c.l.b16 %v258
        %v322 = vunpack.c.l.b16 %v259
        %v323 = vunpack.c.l.b16 %v260
        %v324 = vunpack.c.l.b16 %v261
        %v325 = vunpack.c.l.b16 %v262
        %v326 = vunpack.c.l.b16 %v263
        %v327 = vunpack.c.l.b16 %v264
        %v328 = vunpack.c.l.b16 %v265
        %v329 = vpack.c.b16 %v314, %v313
        %v330 = vpack.c.b16 %v316, %v315
        %v331 = vpack.c.b16 %v318, %v317
        %v332 = vpack.c.b16 %v320, %v319
        %v333 = vpack.c.b16 %v322, %v321
        %v334 = vpack.c.b16 %v324, %v323
        %v335 = vpack.c.b16 %v326, %v325
        %v336 = vpack.c.b16 %v328, %v327
        %345 = vmatprep.subr.bf16.mxu0 0
        %346 = vmatpush1.bf16.msra.mxu0 %v336
        %347 = vmatprep.subr.bf16.mxu0 0
        %348 = vmatpush1.bf16.msra.mxu0 %v335
        %349 = vmatprep.subr.bf16.mxu0 0
        %350 = vmatpush1.bf16.msra.mxu0 %v334
        %351 = vmatprep.subr.bf16.mxu0 0
        %352 = vmatpush1.bf16.msra.mxu0 %v333
        %353 = vmatprep.subr.bf16.mxu0 0
        %354 = vmatpush1.bf16.msra.mxu0 %v332
        %355 = vmatprep.subr.bf16.mxu0 0
        %356 = vmatpush1.bf16.msra.mxu0 %v331
        %357 = vmatprep.subr.bf16.mxu0 0
        %358 = vmatpush1.bf16.msra.mxu0 %v330
        %359 = vmatprep.subr.bf16.mxu0 0
        %360 = vmatpush1.bf16.msra.mxu0 %v329
        %361 = vmatprep.subr.bf16.mxu0 0
        %362 = vmatpush2.bf16.msra.mxu0 0
        %363 = vmatprep.subr.bf16.mxu0 0
        %364 = vmatpush2.bf16.msra.mxu0 0
        %365 = vmatprep.subr.bf16.mxu0 0
        %366 = vmatpush2.bf16.msra.mxu0 0
        %367 = vmatprep.subr.bf16.mxu0 0
        %368 = vmatpush2.bf16.msra.mxu0 0
        %369 = vmatprep.subr.bf16.mxu0 0
        %370 = vmatpush2.bf16.msra.mxu0 0
        %371 = vmatprep.subr.bf16.mxu0 0
        %372 = vmatpush2.bf16.msra.mxu0 0
        %373 = vmatprep.subr.bf16.mxu0 0
        %374 = vmatpush2.bf16.msra.mxu0 0
        %375 = vmatprep.subr.bf16.mxu0 0
        %376 = vmatpush2.bf16.msra.mxu0 0
        %377 = vmatprep.mubr.bf16.mxu0 0
        %378 = vmatmul.mubr.bf16.gmra.mxu0 %v289
        %v379 = vpop.f32.mrf.mxu0
        %v380 = vadd.f32 %v271, %v379
        %v381 = vpop.f32.mrf.mxu0
        %v382 = vpop.f32.mrf.mxu0
        %v383 = vadd.f32 %v271, %v382
        %v384 = vpop.f32.mrf.mxu0
        %385 = vmatprep.mubr.bf16.mxu0 0
        %386 = vmatmul.mubr.bf16.gmra.mxu0 %v290
        %v387 = vpop.f32.mrf.mxu0
        %v388 = vadd.f32 %v271, %v387
        %v389 = vpop.f32.mrf.mxu0
        %v390 = vpop.f32.mrf.mxu0
        %v391 = vadd.f32 %v271, %v390
        %v392 = vpop.f32.mrf.mxu0
        %393 = vmatprep.mubr.bf16.mxu0 0
        %394 = vmatmul.mubr.bf16.gmra.mxu0 %v291
        %v395 = vpop.f32.mrf.mxu0
        %v396 = vadd.f32 %v271, %v395
        %v397 = vpop.f32.mrf.mxu0
        %v398 = vpop.f32.mrf.mxu0
        %v399 = vadd.f32 %v271, %v398
        %v400 = vpop.f32.mrf.mxu0
        %401 = vmatprep.mubr.bf16.mxu0 0
        %402 = vmatmul.mubr.bf16.gmra.mxu0 %v292
        %v403 = vpop.f32.mrf.mxu0
        %v404 = vadd.f32 %v271, %v403
        %v405 = vpop.f32.mrf.mxu0
        %v406 = vpop.f32.mrf.mxu0
        %v407 = vadd.f32 %v271, %v406
        %v408 = vpop.f32.mrf.mxu0
        %409 = vdwg.mxu0
        %v410 = vmax.f32 %v380, 0.0
        %v411 = vmax.f32 %v383, 0.0
        %v412 = vmax.f32 %v388, 0.0
        %v413 = vmax.f32 %v391, 0.0
        %v414 = vmax.f32 %v396, 0.0
        %v415 = vmax.f32 %v399, 0.0
        %v416 = vmax.f32 %v404, 0.0
        %v417 = vmax.f32 %v407, 0.0
        %v418 = vpack.c.bf16 %v411, %v410
        %v419 = vpack.c.bf16 %v413, %v412
        %v420 = vpack.c.bf16 %v415, %v414
        %v421 = vpack.c.bf16 %v417, %v416
        %v426 = vunpack.c.l.b16 %v418
        %v427 = vunpack.c.h.b16 %v418
        %v428 = vunpack.c.l.b16 %v419
        %v429 = vunpack.c.h.b16 %v419
        %v430 = vunpack.c.l.b16 %v420
        %v431 = vunpack.c.h.b16 %v420
        %v432 = vunpack.c.l.b16 %v421
        %v433 = vunpack.c.h.b16 %v421
        %v434 = vpack.c.b16 %v426, %v426
        %v435 = vpack.c.b16 %v427, %v427
        %v436 = vpack.c.b16 %v428, %v428
        %v437 = vpack.c.b16 %v429, %v429
        %v438 = vpack.c.b16 %v430, %v430
        %v439 = vpack.c.b16 %v431, %v431
        %v440 = vpack.c.b16 %v432, %v432
        %v441 = vpack.c.b16 %v433, %v433
        %450 = vst [vmem:[%s235] sm:$0xf] %v434
        %451 = vst [vmem:[%s235 + $0x4] sm:$0xf] %v435
        %452 = vst [vmem:[%s235 + $0x8] sm:$0xf] %v436
        %453 = vst [vmem:[%s235 + $0xc] sm:$0xf] %v437
        %454 = vst [vmem:[%s235 + $0x10] sm:$0xf] %v438
        %455 = vst [vmem:[%s235 + $0x14] sm:$0xf] %v439
        %456 = vst [vmem:[%s235 + $0x18] sm:$0xf] %v440
        %457 = vst [vmem:[%s235 + $0x1c] sm:$0xf] %v441
        %s458 = sand.u32 %s121, 1
        %s459 = scalar_lea.sflag [#allocation4], %s458
        %s460 = sand.u32 %s121, 1
        %s461 = smul.addr %s460, 32
        %s462 = scalar_lea.vmem [#allocation7], %s461
        // Predicated region
        $region41: #{tpu_custom_call.1} parent=31 // pred_check
          %p463 = pneg %p131
        $region42: #{tpu_custom_call.1} parent=31 // pred_check_branch
          %465 = sbr.rel (%p463) target = $region44
        $region43: #{tpu_custom_call.1} parent=31 // pred_region
          %s466 = smul.u32 8, %s25
          %s468 = ssub.s32 512, 512
          %469 = vsyncadd %s459, %s468
          %s470 = sadd.s32 %s26, %s466
          %s471 = smul.addr %s470, 64
          %s472 = scalar_lea.hbm %s3, %s471
          %s473 = sshll.u32 %s462, 4
          %s474 = int_to_ptr.vmem [resolvable:$true] %s473
          %479 = dma.vmem_to_hbm [thread:$0]  %s474, 512, %s472, %s459, 64, 64, 4
        $region44: #{tpu_custom_call.1} parent=31 // pred_fallthru
          _
      $region32: #{tpu_custom_call.1} parent=5 // pred_fallthru
        _
      %p480 = scmp.le.s32.totalorder 2, %s16
      // Predicated region
      $region45: #{tpu_custom_call.1} parent=5 // pred_check
        %p481 = pneg %p480
      $region46: #{tpu_custom_call.1} parent=5 // pred_check_branch
        %483 = sbr.rel (%p481) target = $region48
      $region47: #{tpu_custom_call.1} parent=5 // pred_region
        %s484 = ssub.s32 %s16, 2
        // Predicated region
        $region49: #{tpu_custom_call.1} parent=47 // pred_check
          %p485 = pneg %p137
        $region50: #{tpu_custom_call.1} parent=47 // pred_check_branch
          %487 = sbr.rel (%p485) target = $region52
        $region51: #{tpu_custom_call.1} parent=47 // pred_region
          %s488 = sand.u32 %s122, 1
          %s489 = scalar_lea.sflag [#allocation4], %s488
          %s490 = sand.u32 %s122, 1
          %s491 = smul.addr %s490, 32
          %s492 = scalar_lea.vmem [#allocation7], %s491
          %493 = dma.done %s489, 512
        $region52: #{tpu_custom_call.1} parent=47 // pred_fallthru
          _
      $region48: #{tpu_custom_call.1} parent=5 // pred_fallthru
        _
    $region6: #{tpu_custom_call.1} parent=1 // loop_footer
      %s20 = sadd.s32 1, %s16
    $region7: #{tpu_custom_call.1} parent=1 // loop_footer_branch
      %15 = sbr.rel target = $region3
    $region8: #{tpu_custom_call.1} parent=1 // loop_exit
      _
    %494 = vsyncpa [#allocation3], 1
    %s495 = scalar_lea.sflag [#allocation3], 1
    %496 = vsyncpa %s495, 1
    %497 = vsyncpa [#allocation6], 1
    %498 = vsyncpa [#allocation4], 1
    %s499 = scalar_lea.sflag [#allocation4], 1
    %500 = vsyncpa %s499, 1

</llo_original>
